<compile_context>
chip_gen: v7x
topology: tpu7x:2x2x1
jax: 0.10.0
libtpu: 0.0.40
codegen_flags: <defaults>
</compile_context>

<pallas_src>
import functools

import jax
import jax.numpy as jnp
from jax.experimental import pallas as pl
from jax.experimental.pallas import tpu as pltpu


# ---------------------------------------------------------------------------
# Kernels (channels-last: lanes carry C, H*W lives on sublanes)
# ---------------------------------------------------------------------------

def _mlp_gates(y, w1t_ref, w2r_ref, hidden):
    """y: (Bt, C) pooled activations (f32). Returns sigmoid gates (Bt, C) f32.

    fc2 uses   logits[b,c] = sum_i y1[b,i] * (y1[b,:] @ W2r[i])   with
    W2r: (hidden, hidden, C), so there is no flattened outer product and every
    matmul output is lane-dense over C.
    """
    y1 = jnp.maximum(
        jnp.dot(y, w1t_ref[...], preferred_element_type=jnp.float32), 0.0)     # (Bt, h)
    logits = jnp.zeros(y.shape, dtype=jnp.float32)
    for i in range(hidden):                     # hidden = C // reduction (small, static)
        t = jnp.dot(y1, w2r_ref[i], preferred_element_type=jnp.float32)        # (Bt, C)
        logits = logits + y1[:, i:i + 1] * t
    return jax.nn.sigmoid(logits)


def _se_fused_kernel(x_ref, w1t_ref, w2r_ref, o_ref, *, hidden, inv_hw):
    """Single-block path for small tensors: pool + MLP + excite, one HBM read of x."""
    x = x_ref[...].astype(jnp.float32)                          # (B, HW, C)
    y = jnp.sum(x, axis=1) * inv_hw                             # (B, C)
    s = _mlp_gates(y, w1t_ref, w2r_ref, hidden)                 # (B, C)
    o_ref[...] = (x * s[:, None, :]).astype(o_ref.dtype)


def _se_gates_kernel(x_ref, w1t_ref, w2r_ref, s_ref, acc_ref, *, hidden, inv_hw):
    """Pass 1: streamed global average pool over HW tiles + batched squeeze MLP."""
    j = pl.program_id(1)                 # HW-tile index (reduction axis, minor)

    @pl.when(j == 0)
    def _():
        acc_ref[...] = jnp.zeros_like(acc_ref)

    acc_ref[...] += jnp.sum(x_ref[...].astype(jnp.float32), axis=1)     # (Bt, C)

    @pl.when(j == pl.num_programs(1) - 1)
    def _():
        y = acc_ref[...] * inv_hw
        s_ref[...] = _mlp_gates(y, w1t_ref, w2r_ref, hidden).astype(s_ref.dtype)


def _se_excite_kernel(x_ref, s_ref, o_ref):
    """Pass 2: elementwise gate broadcast; lane-dense (..., C) stores."""
    x = x_ref[...].astype(jnp.float32)                          # (Bt, HWt, C)
    s = s_ref[...].astype(jnp.float32)                          # (Bt, C)
    o_ref[...] = (x * s[:, None, :]).astype(o_ref.dtype)


# ---------------------------------------------------------------------------
# Wrapper
# ---------------------------------------------------------------------------

def _pick_hw_tile(hw, bt, c, itemsize, budget_bytes=2 << 20):
    """Largest divisor of hw that is a multiple of 8 and keeps one
    (bt, hw_tile, C) block under the budget; falls back to hw itself."""
    cands = [d for d in range(8, hw + 1, 8) if hw % d == 0]
    if not cands:
        return hw
    tile = cands[0]
    for d in cands:
        if bt * d * c * itemsize <= budget_bytes:
            tile = max(tile, d)
    return tile


def se_layer_pallas(x, w1, w2, *, hw_tile=None, two_phase=None):
    """x: (B, C, H, W); w1: (C//r, C); w2: (C, (C//r)^2). Matches SELayer.forward."""
    b, c, H, W = x.shape
    hidden = w1.shape[0]
    hw = H * W
    assert w2.shape == (c, hidden * hidden)
    itemsize = jnp.dtype(x.dtype).itemsize

    # Channels-last so the excite stores are lane-dense (C on lanes). Wrapper-side
    # transpose is layout plumbing; the kernel-side stores become unmasked vst.
    x_cl = jnp.transpose(x, (0, 2, 3, 1)).reshape(b, hw, c)
    w1t = jnp.transpose(w1)                                             # (C, hidden)
    w2r = jnp.transpose(w2.reshape(c, hidden, hidden), (1, 2, 0))       # (h, h, C)
    weight_bytes = (w1t.size + w2r.size) * 4

    if two_phase is None:
        two_phase = (b * hw * c * max(itemsize, 4) + weight_bytes) > (4 << 20)

    if not two_phase:
        # --- fused single-block path (tiny shapes): no grid, one HBM read of x.
        need = 3 * b * hw * c * max(itemsize, 4) + weight_bytes + (4 << 20)
        vmem_limit = int(min(max(need, 16 << 20), 64 << 20))
        out_cl = pl.pallas_call(
            functools.partial(_se_fused_kernel, hidden=hidden, inv_hw=1.0 / hw),
            out_shape=jax.ShapeDtypeStruct((b, hw, c), x.dtype),
            compiler_params=pltpu.CompilerParams(vmem_limit_bytes=vmem_limit),
        )(x_cl, w1t, w2r)
        return jnp.transpose(out_cl.reshape(b, H, W, c), (0, 3, 1, 2))

    # --- two-phase path: pool pass (reduction over HW tiles) + gate pass.
    if b <= 8 or b % 8 != 0:
        b_tile = b          # keep (Bt, C) blocks full-dim / 8-aligned
    else:
        b_tile = 8
    if hw_tile is None:
        hw_tile = _pick_hw_tile(hw, b_tile, c, itemsize)
    assert hw % hw_tile == 0, "hw_tile must divide H*W"
    num_b = b // b_tile
    num_hw = hw // hw_tile

    block_bytes = b_tile * hw_tile * c * itemsize
    vmem_limit = int(min(max(5 * block_bytes + weight_bytes + (4 << 20), 16 << 20),
                         64 << 20))

    # Pass 1: pooled gates (B, C). Output block is resident across the HW axis.
    gates = pl.pallas_call(
        functools.partial(_se_gates_kernel, hidden=hidden, inv_hw=1.0 / hw),
        out_shape=jax.ShapeDtypeStruct((b, c), jnp.float32),
        grid=(num_b, num_hw),
        in_specs=[
            pl.BlockSpec((b_tile, hw_tile, c), lambda bi, hj: (bi, hj, 0)),
            pl.BlockSpec((c, hidden), lambda bi, hj: (0, 0)),
            pl.BlockSpec((hidden, hidden, c), lambda bi, hj: (0, 0, 0)),
        ],
        out_specs=pl.BlockSpec((b_tile, c), lambda bi, hj: (bi, 0)),
        scratch_shapes=[pltpu.VMEM((b_tile, c), jnp.float32)],
        compiler_params=pltpu.CompilerParams(
            dimension_semantics=("parallel", "arbitrary"),
            vmem_limit_bytes=vmem_limit),
    )(x_cl, w1t, w2r)

    # Pass 2: excite (fully parallel, streamed over HW tiles).
    out_cl = pl.pallas_call(
        _se_excite_kernel,
        out_shape=jax.ShapeDtypeStruct((b, hw, c), x.dtype),
        grid=(num_b, num_hw),
        in_specs=[
            pl.BlockSpec((b_tile, hw_tile, c), lambda bi, hj: (bi, hj, 0)),
            pl.BlockSpec((b_tile, c), lambda bi, hj: (bi, 0)),
        ],
        out_specs=pl.BlockSpec((b_tile, hw_tile, c), lambda bi, hj: (bi, hj, 0)),
        compiler_params=pltpu.CompilerParams(
            dimension_semantics=("parallel", "parallel"),
            vmem_limit_bytes=vmem_limit),
    )(x_cl, gates)

    return jnp.transpose(out_cl.reshape(b, H, W, c), (0, 3, 1, 2))


def se_layer_ref(x, w1, w2):
    """Pure-JAX reference mirroring the PyTorch forward."""
    b, c, H, W = x.shape
    hidden = w1.shape[0]
    y = jnp.mean(x, axis=(2, 3))                                 # (B, C)
    y1 = jax.nn.relu(y @ w1.T)                                   # (B, h)
    yo = jnp.einsum("bi,bj->bij", y1, y1)                        # (B, h, h)
    s = jax.nn.sigmoid(yo.reshape(b, hidden * hidden) @ w2.T)    # (B, C)
    return x * s[:, :, None, None]


if __name__ == "__main__":
    B, C, H, W = 2, 64, 8, 8
    reduction = 16
    hidden = C // reduction                  # 4
    bilinear_dim = hidden * hidden           # 16

    key = jax.random.PRNGKey(0)
    kx, k1, k2 = jax.random.split(key, 3)
    x = jax.random.normal(kx, (B, C, H, W), dtype=jnp.float32)
    w1 = jax.random.normal(k1, (hidden, C), dtype=jnp.float32) * (1.0 / jnp.sqrt(C))
    w2 = jax.random.normal(k2, (C, bilinear_dim), dtype=jnp.float32) * (
        1.0 / jnp.sqrt(bilinear_dim))

    ref = se_layer_ref(x, w1, w2)

    # 1) Small-shape path: single fused block, no grid.
    out_fused = jax.block_until_ready(se_layer_pallas(x, w1, w2))
    assert out_fused.shape == (B, C, H, W)
    assert jnp.allclose(out_fused, ref, atol=1e-5, rtol=1e-5), "fused path mismatch"

    # 2) Streamed two-phase path (pool pass + gate pass) with an HW-tiled grid.
    out_tiled = jax.block_until_ready(
        se_layer_pallas(x, w1, w2, two_phase=True, hw_tile=16))
    assert jnp.allclose(out_tiled, ref, atol=1e-5, rtol=1e-5), "tiled path mismatch"

    # 3) bf16 activations: halves HBM traffic on this bandwidth-bound op
    #    (compute stays in f32 in-kernel; only the final store rounds to bf16).
    x_bf16 = x.astype(jnp.bfloat16)
    ref_bf16 = se_layer_ref(x_bf16.astype(jnp.float32), w1, w2)
    out_bf16 = jax.block_until_ready(
        se_layer_pallas(x_bf16, w1, w2, two_phase=True, hw_tile=16))
    assert out_bf16.dtype == jnp.bfloat16
    assert jnp.allclose(out_bf16.astype(jnp.float32), ref_bf16,
                        atol=2e-2, rtol=2e-2), "bf16 path mismatch"

    print("KERNEL_OK")
</pallas_src>

<mosaic_0001>
module attributes {stable_mosaic.version = 11 : i64} {
  func.func @_se_fused_kernel(%arg0: memref<2x64x64xf32, #tpu.memory_space<vmem>>, %arg1: memref<64x4xf32, #tpu.memory_space<vmem>>, %arg2: memref<4x4x64xf32, #tpu.memory_space<vmem>>, %arg3: memref<2x64x64xf32, #tpu.memory_space<vmem>>) attributes {dimension_semantics = [], scalar_prefetch = 0 : i64, scratch_operands = 0 : i64, tpu.core_type = #tpu.core_type<tc>} {
    %c0 = arith.constant 0 : index
    %c0_0 = arith.constant 0 : index
    %c0_1 = arith.constant 0 : index
    %0 = vector.load %arg0[%c0, %c0_0, %c0_1] : memref<2x64x64xf32, #tpu.memory_space<vmem>>, vector<2x64x64xf32>
    %cst = arith.constant dense<0.000000e+00> : vector<2x64xf32>
    %1 = vector.multi_reduction <add>, %0, %cst [1] : vector<2x64x64xf32> to vector<2x64xf32>
    %cst_2 = arith.constant 1.562500e-02 : f32
    %2 = vector.broadcast %cst_2 : f32 to vector<2x64xf32>
    %3 = arith.mulf %1, %2 : vector<2x64xf32>
    %c0_3 = arith.constant 0 : index
    %c0_4 = arith.constant 0 : index
    %4 = vector.load %arg1[%c0_3, %c0_4] : memref<64x4xf32, #tpu.memory_space<vmem>>, vector<64x4xf32>
    %cst_5 = arith.constant dense<0.000000e+00> : vector<2x4xf32>
    %5 = tpu.matmul %3, %4, %cst_5 {dimension_numbers = #tpu.dot_dimension_numbers<[1], [0], [0], [1], [0, 0, 1, 1], [], []>} : vector<2x64xf32>, vector<64x4xf32>, vector<2x4xf32> -> vector<2x4xf32>
    %cst_6 = arith.constant 0.000000e+00 : f32
    %6 = vector.broadcast %cst_6 : f32 to vector<2x4xf32>
    %7 = arith.maximumf %5, %6 : vector<2x4xf32>
    %cst_7 = arith.constant 0.000000e+00 : f32
    %8 = vector.broadcast %cst_7 : f32 to vector<2x64xf32>
    %c0_8 = arith.constant 0 : index
    %c0_9 = arith.constant 0 : index
    %c0_10 = arith.constant 0 : index
    %9 = vector.load %arg2[%c0_8, %c0_9, %c0_10] : memref<4x4x64xf32, #tpu.memory_space<vmem>>, vector<1x4x64xf32>
    %10 = vector.shape_cast %9 : vector<1x4x64xf32> to vector<4x64xf32>
    %cst_11 = arith.constant dense<0.000000e+00> : vector<2x64xf32>
    %11 = tpu.matmul %7, %10, %cst_11 {dimension_numbers = #tpu.dot_dimension_numbers<[1], [0], [0], [1], [0, 0, 1, 1], [], []>} : vector<2x4xf32>, vector<4x64xf32>, vector<2x64xf32> -> vector<2x64xf32>
    %12 = vector.extract_strided_slice %7 {offsets = [0, 0], sizes = [2, 1], strides = [1, 1]} : vector<2x4xf32> to vector<2x1xf32>
    %13 = vector.broadcast %12 : vector<2x1xf32> to vector<2x64xf32>
    %14 = arith.mulf %13, %11 : vector<2x64xf32>
    %15 = arith.addf %8, %14 : vector<2x64xf32>
    %c1 = arith.constant 1 : index
    %c0_12 = arith.constant 0 : index
    %c0_13 = arith.constant 0 : index
    %16 = vector.load %arg2[%c1, %c0_12, %c0_13] : memref<4x4x64xf32, #tpu.memory_space<vmem>>, vector<1x4x64xf32>
    %17 = vector.shape_cast %16 : vector<1x4x64xf32> to vector<4x64xf32>
    %cst_14 = arith.constant dense<0.000000e+00> : vector<2x64xf32>
    %18 = tpu.matmul %7, %17, %cst_14 {dimension_numbers = #tpu.dot_dimension_numbers<[1], [0], [0], [1], [0, 0, 1, 1], [], []>} : vector<2x4xf32>, vector<4x64xf32>, vector<2x64xf32> -> vector<2x64xf32>
    %19 = vector.extract_strided_slice %7 {offsets = [0, 1], sizes = [2, 1], strides = [1, 1]} : vector<2x4xf32> to vector<2x1xf32>
    %20 = vector.broadcast %19 : vector<2x1xf32> to vector<2x64xf32>
    %21 = arith.mulf %20, %18 : vector<2x64xf32>
    %22 = arith.addf %15, %21 : vector<2x64xf32>
    %c2 = arith.constant 2 : index
    %c0_15 = arith.constant 0 : index
    %c0_16 = arith.constant 0 : index
    %23 = vector.load %arg2[%c2, %c0_15, %c0_16] : memref<4x4x64xf32, #tpu.memory_space<vmem>>, vector<1x4x64xf32>
    %24 = vector.shape_cast %23 : vector<1x4x64xf32> to vector<4x64xf32>
    %cst_17 = arith.constant dense<0.000000e+00> : vector<2x64xf32>
    %25 = tpu.matmul %7, %24, %cst_17 {dimension_numbers = #tpu.dot_dimension_numbers<[1], [0], [0], [1], [0, 0, 1, 1], [], []>} : vector<2x4xf32>, vector<4x64xf32>, vector<2x64xf32> -> vector<2x64xf32>
    %26 = vector.extract_strided_slice %7 {offsets = [0, 2], sizes = [2, 1], strides = [1, 1]} : vector<2x4xf32> to vector<2x1xf32>
    %27 = vector.broadcast %26 : vector<2x1xf32> to vector<2x64xf32>
    %28 = arith.mulf %27, %25 : vector<2x64xf32>
    %29 = arith.addf %22, %28 : vector<2x64xf32>
    %c3 = arith.constant 3 : index
    %c0_18 = arith.constant 0 : index
    %c0_19 = arith.constant 0 : index
    %30 = vector.load %arg2[%c3, %c0_18, %c0_19] : memref<4x4x64xf32, #tpu.memory_space<vmem>>, vector<1x4x64xf32>
    %31 = vector.shape_cast %30 : vector<1x4x64xf32> to vector<4x64xf32>
    %cst_20 = arith.constant dense<0.000000e+00> : vector<2x64xf32>
    %32 = tpu.matmul %7, %31, %cst_20 {dimension_numbers = #tpu.dot_dimension_numbers<[1], [0], [0], [1], [0, 0, 1, 1], [], []>} : vector<2x4xf32>, vector<4x64xf32>, vector<2x64xf32> -> vector<2x64xf32>
    %33 = vector.extract_strided_slice %7 {offsets = [0, 3], sizes = [2, 1], strides = [1, 1]} : vector<2x4xf32> to vector<2x1xf32>
    %34 = vector.broadcast %33 : vector<2x1xf32> to vector<2x64xf32>
    %35 = arith.mulf %34, %32 : vector<2x64xf32>
    %36 = arith.addf %29, %35 : vector<2x64xf32>
    %37 = arith.negf %36 : vector<2x64xf32>
    %38 = math.exp %37 : vector<2x64xf32>
    %cst_21 = arith.constant 1.000000e+00 : f32
    %39 = vector.broadcast %cst_21 : f32 to vector<2x64xf32>
    %40 = arith.addf %39, %38 : vector<2x64xf32>
    %41 = arith.divf %39, %40 : vector<2x64xf32>
    %42 = vector.shape_cast %41 : vector<2x64xf32> to vector<2x1x64xf32>
    %43 = vector.broadcast %42 : vector<2x1x64xf32> to vector<2x64x64xf32>
    %44 = arith.mulf %0, %43 : vector<2x64x64xf32>
    %c0_22 = arith.constant 0 : index
    %c0_23 = arith.constant 0 : index
    %c0_24 = arith.constant 0 : index
    %45 = vector.load %arg3[%c0_22, %c0_23, %c0_24] : memref<2x64x64xf32, #tpu.memory_space<vmem>>, vector<2x64x64xf32>
    tpu.vector_store %arg3[%c0_22, %c0_23, %c0_24], %44 {strides = array<i32>} : memref<2x64x64xf32, #tpu.memory_space<vmem>>, vector<2x64x64xf32>,
    return
  }
}

</mosaic_0001>

<llo_original>
// kernel: tpu_custom_call.1
$region0: #{tpu_custom_call.1}
  #allocation0 [shape = 'u32[]', space=smem, size = 0x4, offset = 0x4, fixed_abs, tag = 'smem constant byte address 0x4 - core index']
  #allocation1 [shape = 'u32[144,128]{1,0:T(1,128)}', space=vmem, size = 0x12000, scoped, tag = 'internal scratch']
  %s0 = inlined_call_operand.hbm [shape: f32[2,64,64], index: 0, kind: input, shape index: {}]
  %s1 = inlined_call_operand.vmem [shape: f32[64,4], index: 1, kind: input, shape index: {}]
  %s2 = inlined_call_operand.vmem [shape: f32[4,4,64], index: 2, kind: input, shape index: {}]
  %s3 = inlined_call_operand.hbm [shape: f32[2,64,64], index: 3, kind: output, shape index: {}]
  %s4 = sld [smem:[#allocation0]]
  $region26: #{tpu_custom_call.1} parent=0
    _
  %s6 = ssub.s32 1, %s4
  %s7 = scalar_select 0, %s6, %s4
  $region1: #{tpu_custom_call.1} parent=0
    #allocation2 [shape = 'u8[65536]{0}', space=vmem, size = 0x10000, scoped, tag = 'input window, operand 0, single buffered']
    #allocation3 [shape = 's32[1]{0}', space=sflag, size = 0x4, scoped, tag = 'scoped memory for tpu_custom_call.1']
    #allocation4 [shape = 's32[1]{0}', space=sflag, size = 0x4, scoped, tag = 'scoped memory for tpu_custom_call.1']
    #allocation5 [shape = 'u8[65536]{0}', space=vmem, size = 0x10000, scoped, tag = 'output window, operand 0, single buffered']
    %8 = vsyncpa [#allocation3], 0
    %9 = vsyncpa [#allocation4], 0
    // Predicated region
    $region2: #{tpu_custom_call.1} parent=1 // pred_check
      _
    $region3: #{tpu_custom_call.1} parent=1 // pred_check_branch
      %11 = sbr.rel (0) target = $region5
    $region4: #{tpu_custom_call.1} parent=1 // pred_region
      %s13 = ssub.s32 2048, 2048
      %14 = vsyncadd [#allocation3], %s13
      %s15 = sshll.u32 [#allocation2], 4
      %s16 = int_to_ptr.vmem [resolvable:$true] %s15
      %21 = dma.hbm_to_vmem [thread:$0]  %s0, 2048, %s16, [#allocation3], 128, 128, 8
    $region5: #{tpu_custom_call.1} parent=1 // pred_fallthru
      _
    // Predicated region
    $region6: #{tpu_custom_call.1} parent=1 // pred_check
      _
    $region7: #{tpu_custom_call.1} parent=1 // pred_check_branch
      %23 = sbr.rel (0) target = $region9
    $region8: #{tpu_custom_call.1} parent=1 // pred_region
      _
    $region9: #{tpu_custom_call.1} parent=1 // pred_fallthru
      _
    // Predicated region
    $region10: #{tpu_custom_call.1} parent=1 // pred_check
      _
    $region11: #{tpu_custom_call.1} parent=1 // pred_check_branch
      %25 = sbr.rel (0) target = $region13
    $region12: #{tpu_custom_call.1} parent=1 // pred_region
      _
    $region13: #{tpu_custom_call.1} parent=1 // pred_fallthru
      _
    // Predicated region
    $region14: #{tpu_custom_call.1} parent=1 // pred_check
      _
    $region15: #{tpu_custom_call.1} parent=1 // pred_check_branch
      %27 = sbr.rel (0) target = $region17
    $region16: #{tpu_custom_call.1} parent=1 // pred_region
      %28 = dma.done [#allocation3], 2048
    $region17: #{tpu_custom_call.1} parent=1 // pred_fallthru
      _
    %v29 = vld [vmem:[#allocation2] sm:$0xff]
    %v30 = vld [vmem:[#allocation2 + $0x8] sm:$0xff]
    %v31 = vld [vmem:[#allocation2 + $0x10] sm:$0xff]
    %v32 = vld [vmem:[#allocation2 + $0x18] sm:$0xff]
    %v33 = vld [vmem:[#allocation2 + $0x20] sm:$0xff]
    %v34 = vld [vmem:[#allocation2 + $0x28] sm:$0xff]
    %v35 = vld [vmem:[#allocation2 + $0x30] sm:$0xff]
    %v36 = vld [vmem:[#allocation2 + $0x38] sm:$0xff]
    %v37 = vld [vmem:[#allocation2 + $0x40] sm:$0xff]
    %v38 = vld [vmem:[#allocation2 + $0x48] sm:$0xff]
    %v39 = vld [vmem:[#allocation2 + $0x50] sm:$0xff]
    %v40 = vld [vmem:[#allocation2 + $0x58] sm:$0xff]
    %v41 = vld [vmem:[#allocation2 + $0x60] sm:$0xff]
    %v42 = vld [vmem:[#allocation2 + $0x68] sm:$0xff]
    %v43 = vld [vmem:[#allocation2 + $0x70] sm:$0xff]
    %v44 = vld [vmem:[#allocation2 + $0x78] sm:$0xff]
    %vm45 = vcmask 523264
    %v46 = vsel %vm45, %v29, 0.0
    %v47 = vsel %vm45, %v30, 0.0
    %v48 = vadd.f32 %v46, %v47
    %v49 = vsel %vm45, %v31, 0.0
    %v50 = vadd.f32 %v48, %v49
    %v51 = vsel %vm45, %v32, 0.0
    %v52 = vadd.f32 %v50, %v51
    %v53 = vsel %vm45, %v33, 0.0
    %v54 = vadd.f32 %v52, %v53
    %v55 = vsel %vm45, %v34, 0.0
    %v56 = vadd.f32 %v54, %v55
    %v57 = vsel %vm45, %v35, 0.0
    %v58 = vadd.f32 %v56, %v57
    %v59 = vsel %vm45, %v36, 0.0
    %v60 = vadd.f32 %v58, %v59
    %v61 = vrot.slane %v60, 4
    %v62 = vadd.f32 %v60, %v61
    %v63 = vrot.slane %v62, 2
    %v64 = vadd.f32 %v62, %v63
    %v65 = vrot.slane %v64, 1
    %v66 = vadd.f32 %v64, %v65
    %v67 = vsel %vm45, %v37, 0.0
    %v68 = vsel %vm45, %v38, 0.0
    %v69 = vadd.f32 %v67, %v68
    %v70 = vsel %vm45, %v39, 0.0
    %v71 = vadd.f32 %v69, %v70
    %v72 = vsel %vm45, %v40, 0.0
    %v73 = vadd.f32 %v71, %v72
    %v74 = vsel %vm45, %v41, 0.0
    %v75 = vadd.f32 %v73, %v74
    %v76 = vsel %vm45, %v42, 0.0
    %v77 = vadd.f32 %v75, %v76
    %v78 = vsel %vm45, %v43, 0.0
    %v79 = vadd.f32 %v77, %v78
    %v80 = vsel %vm45, %v44, 0.0
    %v81 = vadd.f32 %v79, %v80
    %v82 = vrot.slane %v81, 4
    %v83 = vadd.f32 %v81, %v82
    %v84 = vrot.slane %v83, 2
    %v85 = vadd.f32 %v83, %v84
    %v86 = vrot.slane %v85, 1
    %v87 = vadd.f32 %v85, %v86
    %v88 = vmul.f32 %v66, 0.015625
    %v89 = vmul.f32 %v87, 0.015625
    %v90 = vld [vmem:[%s1] sm:$0xff]
    %v91 = vld [vmem:[%s1 + $0x8] sm:$0xff]
    %v92 = vld [vmem:[%s1 + $0x10] sm:$0xff]
    %v93 = vld [vmem:[%s1 + $0x18] sm:$0xff]
    %v94 = vld [vmem:[%s1 + $0x20] sm:$0xff]
    %v95 = vld [vmem:[%s1 + $0x28] sm:$0xff]
    %v96 = vld [vmem:[%s1 + $0x30] sm:$0xff]
    %v97 = vld [vmem:[%s1 + $0x38] sm:$0xff]
    %vm100 = vcmask 1041409
    %v101 = vsel %vm100, %v89, %v88
    %v102 = vsel %vm45, %v101, 0
    %104 = vmatprep.subr.mxu0 0.0
    %105 = vmatpush1.msra.mxu0 %v90
    %106 = vmatprep.subr.mxu0 0.0
    %107 = vmatpush1.msra.mxu0 %v91
    %108 = vmatprep.subr.mxu0 0.0
    %109 = vmatpush1.msra.mxu0 %v92
    %110 = vmatprep.subr.mxu0 0.0
    %111 = vmatpush1.msra.mxu0 %v93
    %112 = vmatprep.subr.mxu0 0.0
    %113 = vmatpush1.msra.mxu0 %v94
    %114 = vmatprep.subr.mxu0 0.0
    %115 = vmatpush1.msra.mxu0 %v95
    %116 = vmatprep.subr.mxu0 0.0
    %117 = vmatpush1.msra.mxu0 %v96
    %118 = vmatprep.subr.mxu0 0.0
    %119 = vmatpush1.msra.mxu0 %v97
    %120 = vmatprep.subr.mxu0 0.0
    %121 = vmatpush1.msra.mxu0 0.0
    %122 = vmatprep.subr.mxu0 0.0
    %123 = vmatpush1.msra.mxu0 0.0
    %124 = vmatprep.subr.mxu0 0.0
    %125 = vmatpush1.msra.mxu0 0.0
    %126 = vmatprep.subr.mxu0 0.0
    %127 = vmatpush1.msra.mxu0 0.0
    %128 = vmatprep.subr.mxu0 0.0
    %129 = vmatpush1.msra.mxu0 0.0
    %130 = vmatprep.subr.mxu0 0.0
    %131 = vmatpush1.msra.mxu0 0.0
    %132 = vmatprep.subr.mxu0 0.0
    %133 = vmatpush1.msra.mxu0 0.0
    %134 = vmatprep.subr.mxu0 0.0
    %135 = vmatpush1.msra.mxu0 0.0
    %136 = vmatprep.subr.mxu0 0.0
    %137 = vmatpush1.msra.mxu0 0.0
    %138 = vmatprep.subr.mxu0 0.0
    %139 = vmatpush1.msra.mxu0 0.0
    %140 = vmatprep.subr.mxu0 0.0
    %141 = vmatpush1.msra.mxu0 0.0
    %142 = vmatprep.subr.mxu0 0.0
    %143 = vmatpush1.msra.mxu0 0.0
    %144 = vmatprep.subr.mxu0 0.0
    %145 = vmatpush1.msra.mxu0 0.0
    %146 = vmatprep.subr.mxu0 0.0
    %147 = vmatpush1.msra.mxu0 0.0
    %148 = vmatprep.subr.mxu0 0.0
    %149 = vmatpush1.msra.mxu0 0.0
    %150 = vmatprep.subr.mxu0 0.0
    %151 = vmatpush1.msra.mxu0 0.0
    %152 = vmatprep.subr.mxu0 0.0
    %153 = vmatpush1.msra.mxu0 0.0
    %154 = vmatprep.subr.mxu0 0.0
    %155 = vmatpush1.msra.mxu0 0.0
    %156 = vmatprep.subr.mxu0 0.0
    %157 = vmatpush1.msra.mxu0 0.0
    %158 = vmatprep.subr.mxu0 0.0
    %159 = vmatpush1.msra.mxu0 0.0
    %160 = vmatprep.subr.mxu0 0.0
    %161 = vmatpush1.msra.mxu0 0.0
    %162 = vmatprep.subr.mxu0 0.0
    %163 = vmatpush1.msra.mxu0 0.0
    %164 = vmatprep.subr.mxu0 0.0
    %165 = vmatpush1.msra.mxu0 0.0
    %166 = vmatprep.subr.mxu0 0.0
    %167 = vmatpush1.msra.mxu0 0.0
    %168 = vmatprep.mubr.f32.mxu0 0.0
    %169 = vmatmul.mubr.f32.gmra.mrb[0].mxu0 %v102
    %v170 = vpop.f32.mrb[0].mxu0
    %v171 = vadd.f32 0.0, %v170
    %v172 = vpop.f32.mrb[0].mxu0
    %173 = vdwg.mxu0
    %v174 = vmax.f32 %v171, 0.0
    %v175 = vld [vmem:[%s2] sm:$0xf]
    %vm176 = vcmask 31744
    %v178 = vsel %vm176, %v174, 0
    %vm180 = vcmask 1043456
    %v182 = vsel %vm180, %v175, 0
    %184 = vmatprep.subr.mxu0 0.0
    %185 = vmatpush1.msra.mxu0 %v182
    %186 = vmatprep.subr.mxu0 0.0
    %187 = vmatpush1.msra.mxu0 0.0
    %188 = vmatprep.subr.mxu0 0.0
    %189 = vmatpush1.msra.mxu0 0.0
    %190 = vmatprep.subr.mxu0 0.0
    %191 = vmatpush1.msra.mxu0 0.0
    %192 = vmatprep.subr.mxu0 0.0
    %193 = vmatpush1.msra.mxu0 0.0
    %194 = vmatprep.subr.mxu0 0.0
    %195 = vmatpush1.msra.mxu0 0.0
    %196 = vmatprep.subr.mxu0 0.0
    %197 = vmatpush1.msra.mxu0 0.0
    %198 = vmatprep.subr.mxu0 0.0
    %199 = vmatpush1.msra.mxu0 0.0
    %200 = vmatprep.subr.mxu0 0.0
    %201 = vmatpush1.msra.mxu0 0.0
    %202 = vmatprep.subr.mxu0 0.0
    %203 = vmatpush1.msra.mxu0 0.0
    %204 = vmatprep.subr.mxu0 0.0
    %205 = vmatpush1.msra.mxu0 0.0
    %206 = vmatprep.subr.mxu0 0.0
    %207 = vmatpush1.msra.mxu0 0.0
    %208 = vmatprep.subr.mxu0 0.0
    %209 = vmatpush1.msra.mxu0 0.0
    %210 = vmatprep.subr.mxu0 0.0
    %211 = vmatpush1.msra.mxu0 0.0
    %212 = vmatprep.subr.mxu0 0.0
    %213 = vmatpush1.msra.mxu0 0.0
    %214 = vmatprep.subr.mxu0 0.0
    %215 = vmatpush1.msra.mxu0 0.0
    %216 = vmatprep.subr.mxu0 0.0
    %217 = vmatpush1.msra.mxu0 0.0
    %218 = vmatprep.subr.mxu0 0.0
    %219 = vmatpush1.msra.mxu0 0.0
    %220 = vmatprep.subr.mxu0 0.0
    %221 = vmatpush1.msra.mxu0 0.0
    %222 = vmatprep.subr.mxu0 0.0
    %223 = vmatpush1.msra.mxu0 0.0
    %224 = vmatprep.subr.mxu0 0.0
    %225 = vmatpush1.msra.mxu0 0.0
    %226 = vmatprep.subr.mxu0 0.0
    %227 = vmatpush1.msra.mxu0 0.0
    %228 = vmatprep.subr.mxu0 0.0
    %229 = vmatpush1.msra.mxu0 0.0
    %230 = vmatprep.subr.mxu0 0.0
    %231 = vmatpush1.msra.mxu0 0.0
    %232 = vmatprep.subr.mxu0 0.0
    %233 = vmatpush1.msra.mxu0 0.0
    %234 = vmatprep.subr.mxu0 0.0
    %235 = vmatpush1.msra.mxu0 0.0
    %236 = vmatprep.subr.mxu0 0.0
    %237 = vmatpush1.msra.mxu0 0.0
    %238 = vmatprep.subr.mxu0 0.0
    %239 = vmatpush1.msra.mxu0 0.0
    %240 = vmatprep.subr.mxu0 0.0
    %241 = vmatpush1.msra.mxu0 0.0
    %242 = vmatprep.subr.mxu0 0.0
    %243 = vmatpush1.msra.mxu0 0.0
    %244 = vmatprep.subr.mxu0 0.0
    %245 = vmatpush1.msra.mxu0 0.0
    %246 = vmatprep.subr.mxu0 0.0
    %247 = vmatpush1.msra.mxu0 0.0
    %248 = vmatprep.mubr.f32.mxu0 0.0
    %249 = vmatmul.mubr.f32.gmra.mrb[0].mxu0 %v178
    %v250 = vpop.f32.mrb[0].mxu0
    %v251 = vadd.f32 0.0, %v250
    %v252 = vpop.f32.mrb[0].mxu0
    %253 = vdwg.mxu0
    %254 = vset.pattern.permute.xlu0 0
    %255 = vperm.xlu0 %254, %v174
    %v256 = vpop.permute.xlu0 %255
    %v258 = vmul.f32 %v256, %v251
    %v259 = vadd.f32 %v258, 0.0
    %s260 = scalar_lea.vmem %s2, 4
    %v261 = vld [vmem:[%s260] sm:$0xf]
    %v263 = vsel %vm180, %v261, 0
    %265 = vmatprep.subr.mxu0 0.0
    %266 = vmatpush1.msra.mxu0 %v263
    %267 = vmatprep.subr.mxu0 0.0
    %268 = vmatpush1.msra.mxu0 0.0
    %269 = vmatprep.subr.mxu0 0.0
    %270 = vmatpush1.msra.mxu0 0.0
    %271 = vmatprep.subr.mxu0 0.0
    %272 = vmatpush1.msra.mxu0 0.0
    %273 = vmatprep.subr.mxu0 0.0
    %274 = vmatpush1.msra.mxu0 0.0
    %275 = vmatprep.subr.mxu0 0.0
    %276 = vmatpush1.msra.mxu0 0.0
    %277 = vmatprep.subr.mxu0 0.0
    %278 = vmatpush1.msra.mxu0 0.0
    %279 = vmatprep.subr.mxu0 0.0
    %280 = vmatpush1.msra.mxu0 0.0
    %281 = vmatprep.subr.mxu0 0.0
    %282 = vmatpush1.msra.mxu0 0.0
    %283 = vmatprep.subr.mxu0 0.0
    %284 = vmatpush1.msra.mxu0 0.0
    %285 = vmatprep.subr.mxu0 0.0
    %286 = vmatpush1.msra.mxu0 0.0
    %287 = vmatprep.subr.mxu0 0.0
    %288 = vmatpush1.msra.mxu0 0.0
    %289 = vmatprep.subr.mxu0 0.0
    %290 = vmatpush1.msra.mxu0 0.0
    %291 = vmatprep.subr.mxu0 0.0
    %292 = vmatpush1.msra.mxu0 0.0
    %293 = vmatprep.subr.mxu0 0.0
    %294 = vmatpush1.msra.mxu0 0.0
    %295 = vmatprep.subr.mxu0 0.0
    %296 = vmatpush1.msra.mxu0 0.0
    %297 = vmatprep.subr.mxu0 0.0
    %298 = vmatpush1.msra.mxu0 0.0
    %299 = vmatprep.subr.mxu0 0.0
    %300 = vmatpush1.msra.mxu0 0.0
    %301 = vmatprep.subr.mxu0 0.0
    %302 = vmatpush1.msra.mxu0 0.0
    %303 = vmatprep.subr.mxu0 0.0
    %304 = vmatpush1.msra.mxu0 0.0
    %305 = vmatprep.subr.mxu0 0.0
    %306 = vmatpush1.msra.mxu0 0.0
    %307 = vmatprep.subr.mxu0 0.0
    %308 = vmatpush1.msra.mxu0 0.0
    %309 = vmatprep.subr.mxu0 0.0
    %310 = vmatpush1.msra.mxu0 0.0
    %311 = vmatprep.subr.mxu0 0.0
    %312 = vmatpush1.msra.mxu0 0.0
    %313 = vmatprep.subr.mxu0 0.0
    %314 = vmatpush1.msra.mxu0 0.0
    %315 = vmatprep.subr.mxu0 0.0
    %316 = vmatpush1.msra.mxu0 0.0
    %317 = vmatprep.subr.mxu0 0.0
    %318 = vmatpush1.msra.mxu0 0.0
    %319 = vmatprep.subr.mxu0 0.0
    %320 = vmatpush1.msra.mxu0 0.0
    %321 = vmatprep.subr.mxu0 0.0
    %322 = vmatpush1.msra.mxu0 0.0
    %323 = vmatprep.subr.mxu0 0.0
    %324 = vmatpush1.msra.mxu0 0.0
    %325 = vmatprep.subr.mxu0 0.0
    %326 = vmatpush1.msra.mxu0 0.0
    %327 = vmatprep.subr.mxu0 0.0
    %328 = vmatpush1.msra.mxu0 0.0
    %329 = vmatprep.mubr.f32.mxu0 0.0
    %330 = vmatmul.mubr.f32.gmra.mrb[0].mxu0 %v178
    %v331 = vpop.f32.mrb[0].mxu0
    %v332 = vadd.f32 0.0, %v331
    %v333 = vpop.f32.mrb[0].mxu0
    %334 = vdwg.mxu0
    %335 = vset.pattern.permute.xlu0 1
    %336 = vperm.xlu0 %335, %v174
    %v337 = vpop.permute.xlu0 %336
    %v339 = vmul.f32 %v337, %v332
    %v340 = vadd.f32 %v259, %v339
    %s341 = scalar_lea.vmem %s2, 8
    %v342 = vld [vmem:[%s341] sm:$0xf]
    %v344 = vsel %vm180, %v342, 0
    %346 = vmatprep.subr.mxu0 0.0
    %347 = vmatpush1.msra.mxu0 %v344
    %348 = vmatprep.subr.mxu0 0.0
    %349 = vmatpush1.msra.mxu0 0.0
    %350 = vmatprep.subr.mxu0 0.0
    %351 = vmatpush1.msra.mxu0 0.0
    %352 = vmatprep.subr.mxu0 0.0
    %353 = vmatpush1.msra.mxu0 0.0
    %354 = vmatprep.subr.mxu0 0.0
    %355 = vmatpush1.msra.mxu0 0.0
    %356 = vmatprep.subr.mxu0 0.0
    %357 = vmatpush1.msra.mxu0 0.0
    %358 = vmatprep.subr.mxu0 0.0
    %359 = vmatpush1.msra.mxu0 0.0
    %360 = vmatprep.subr.mxu0 0.0
    %361 = vmatpush1.msra.mxu0 0.0
    %362 = vmatprep.subr.mxu0 0.0
    %363 = vmatpush1.msra.mxu0 0.0
    %364 = vmatprep.subr.mxu0 0.0
    %365 = vmatpush1.msra.mxu0 0.0
    %366 = vmatprep.subr.mxu0 0.0
    %367 = vmatpush1.msra.mxu0 0.0
    %368 = vmatprep.subr.mxu0 0.0
    %369 = vmatpush1.msra.mxu0 0.0
    %370 = vmatprep.subr.mxu0 0.0
    %371 = vmatpush1.msra.mxu0 0.0
    %372 = vmatprep.subr.mxu0 0.0
    %373 = vmatpush1.msra.mxu0 0.0
    %374 = vmatprep.subr.mxu0 0.0
    %375 = vmatpush1.msra.mxu0 0.0
    %376 = vmatprep.subr.mxu0 0.0
    %377 = vmatpush1.msra.mxu0 0.0
    %378 = vmatprep.subr.mxu0 0.0
    %379 = vmatpush1.msra.mxu0 0.0
    %380 = vmatprep.subr.mxu0 0.0
    %381 = vmatpush1.msra.mxu0 0.0
    %382 = vmatprep.subr.mxu0 0.0
    %383 = vmatpush1.msra.mxu0 0.0
    %384 = vmatprep.subr.mxu0 0.0
    %385 = vmatpush1.msra.mxu0 0.0
    %386 = vmatprep.subr.mxu0 0.0
    %387 = vmatpush1.msra.mxu0 0.0
    %388 = vmatprep.subr.mxu0 0.0
    %389 = vmatpush1.msra.mxu0 0.0
    %390 = vmatprep.subr.mxu0 0.0
    %391 = vmatpush1.msra.mxu0 0.0
    %392 = vmatprep.subr.mxu0 0.0
    %393 = vmatpush1.msra.mxu0 0.0
    %394 = vmatprep.subr.mxu0 0.0
    %395 = vmatpush1.msra.mxu0 0.0
    %396 = vmatprep.subr.mxu0 0.0
    %397 = vmatpush1.msra.mxu0 0.0
    %398 = vmatprep.subr.mxu0 0.0
    %399 = vmatpush1.msra.mxu0 0.0
    %400 = vmatprep.subr.mxu0 0.0
    %401 = vmatpush1.msra.mxu0 0.0
    %402 = vmatprep.subr.mxu0 0.0
    %403 = vmatpush1.msra.mxu0 0.0
    %404 = vmatprep.subr.mxu0 0.0
    %405 = vmatpush1.msra.mxu0 0.0
    %406 = vmatprep.subr.mxu0 0.0
    %407 = vmatpush1.msra.mxu0 0.0
    %408 = vmatprep.subr.mxu0 0.0
    %409 = vmatpush1.msra.mxu0 0.0
    %410 = vmatprep.mubr.f32.mxu0 0.0
    %411 = vmatmul.mubr.f32.gmra.mrb[0].mxu0 %v178
    %v412 = vpop.f32.mrb[0].mxu0
    %v413 = vadd.f32 0.0, %v412
    %v414 = vpop.f32.mrb[0].mxu0
    %415 = vdwg.mxu0
    %416 = vset.pattern.permute.xlu0 2
    %417 = vperm.xlu0 %416, %v174
    %v418 = vpop.permute.xlu0 %417
    %v420 = vmul.f32 %v418, %v413
    %v421 = vadd.f32 %v340, %v420
    %s422 = scalar_lea.vmem %s2, 12
    %v423 = vld [vmem:[%s422] sm:$0xf]
    %v425 = vsel %vm180, %v423, 0
    %427 = vmatprep.subr.mxu0 0.0
    %428 = vmatpush1.msra.mxu0 %v425
    %429 = vmatprep.subr.mxu0 0.0
    %430 = vmatpush1.msra.mxu0 0.0
    %431 = vmatprep.subr.mxu0 0.0
    %432 = vmatpush1.msra.mxu0 0.0
    %433 = vmatprep.subr.mxu0 0.0
    %434 = vmatpush1.msra.mxu0 0.0
    %435 = vmatprep.subr.mxu0 0.0
    %436 = vmatpush1.msra.mxu0 0.0
    %437 = vmatprep.subr.mxu0 0.0
    %438 = vmatpush1.msra.mxu0 0.0
    %439 = vmatprep.subr.mxu0 0.0
    %440 = vmatpush1.msra.mxu0 0.0
    %441 = vmatprep.subr.mxu0 0.0
    %442 = vmatpush1.msra.mxu0 0.0
    %443 = vmatprep.subr.mxu0 0.0
    %444 = vmatpush1.msra.mxu0 0.0
    %445 = vmatprep.subr.mxu0 0.0
    %446 = vmatpush1.msra.mxu0 0.0
    %447 = vmatprep.subr.mxu0 0.0
    %448 = vmatpush1.msra.mxu0 0.0
    %449 = vmatprep.subr.mxu0 0.0
    %450 = vmatpush1.msra.mxu0 0.0
    %451 = vmatprep.subr.mxu0 0.0
    %452 = vmatpush1.msra.mxu0 0.0
    %453 = vmatprep.subr.mxu0 0.0
    %454 = vmatpush1.msra.mxu0 0.0
    %455 = vmatprep.subr.mxu0 0.0
    %456 = vmatpush1.msra.mxu0 0.0
    %457 = vmatprep.subr.mxu0 0.0
    %458 = vmatpush1.msra.mxu0 0.0
    %459 = vmatprep.subr.mxu0 0.0
    %460 = vmatpush1.msra.mxu0 0.0
    %461 = vmatprep.subr.mxu0 0.0
    %462 = vmatpush1.msra.mxu0 0.0
    %463 = vmatprep.subr.mxu0 0.0
    %464 = vmatpush1.msra.mxu0 0.0
    %465 = vmatprep.subr.mxu0 0.0
    %466 = vmatpush1.msra.mxu0 0.0
    %467 = vmatprep.subr.mxu0 0.0
    %468 = vmatpush1.msra.mxu0 0.0
    %469 = vmatprep.subr.mxu0 0.0
    %470 = vmatpush1.msra.mxu0 0.0
    %471 = vmatprep.subr.mxu0 0.0
    %472 = vmatpush1.msra.mxu0 0.0
    %473 = vmatprep.subr.mxu0 0.0
    %474 = vmatpush1.msra.mxu0 0.0
    %475 = vmatprep.subr.mxu0 0.0
    %476 = vmatpush1.msra.mxu0 0.0
    %477 = vmatprep.subr.mxu0 0.0
    %478 = vmatpush1.msra.mxu0 0.0
    %479 = vmatprep.subr.mxu0 0.0
    %480 = vmatpush1.msra.mxu0 0.0
    %481 = vmatprep.subr.mxu0 0.0
    %482 = vmatpush1.msra.mxu0 0.0
    %483 = vmatprep.subr.mxu0 0.0
    %484 = vmatpush1.msra.mxu0 0.0
    %485 = vmatprep.subr.mxu0 0.0
    %486 = vmatpush1.msra.mxu0 0.0
    %487 = vmatprep.subr.mxu0 0.0
    %488 = vmatpush1.msra.mxu0 0.0
    %489 = vmatprep.subr.mxu0 0.0
    %490 = vmatpush1.msra.mxu0 0.0
    %491 = vmatprep.mubr.f32.mxu0 0.0
    %492 = vmatmul.mubr.f32.gmra.mrb[0].mxu0 %v178
    %v493 = vpop.f32.mrb[0].mxu0
    %v494 = vadd.f32 0.0, %v493
    %v495 = vpop.f32.mrb[0].mxu0
    %496 = vdwg.mxu0
    %497 = vset.pattern.permute.xlu0 3
    %498 = vperm.xlu0 %497, %v174
    %v499 = vpop.permute.xlu0 %498
    %v501 = vmul.f32 %v499, %v494
    %v502 = vadd.f32 %v421, %v501
    %v503 = vxor.u32 %v502, 2147483648
    %v504 = vmul.f32 %v503, 1.442695
    %v505 = vpow.pop %v504
    %v506 = vadd.f32 %v505, 1.0
    %v507 = vrcp.pop %v506
    %v508 = vmul.f32 1.0, %v507
    %v511 = vunpack.c.l.s4 1966171168
    %v512 = vunpack.c.0.s8 %v511
    %v513 = vlaneseq
    %v514 = vshrl.u32 %v513, 7
    %v515 = vsub.s32 %v512, %v514
    %v516 = vrot.slane %v508, %v515
    %v517 = vcombine.high %v516, %v516
    %v519 = vunpack.c.l.s4 1966171168
    %v520 = vunpack.c.0.s8 %v519
    %v521 = vlaneseq
    %v522 = vshrl.u32 %v521, 7
    %v523 = vsub.s32 %v520, %v522
    %v524 = vrot.slane %v516, %v523
    %v526 = vunpack.c.l.s4 1966171168
    %v527 = vunpack.c.0.s8 %v526
    %v528 = vlaneseq
    %v529 = vshrl.u32 %v528, 7
    %v530 = vsub.s32 %v527, %v529
    %v531 = vrot.slane %v517, %v530
    %v532 = vlaneseq
    %v533 = vshrl.u32 %v532, 7
    %v534 = vsub.s32 0, %v533
    %v535 = vrot.slane %v524, %v534
    %v536 = vlaneseq
    %v537 = vshrl.u32 %v536, 7
    %v538 = vsub.s32 0, %v537
    %v539 = vrot.slane %v531, %v538
    %v542 = vmul.f32 %v29, %v535
    %v543 = vmul.f32 %v30, %v535
    %v544 = vmul.f32 %v31, %v535
    %v545 = vmul.f32 %v32, %v535
    %v546 = vmul.f32 %v33, %v535
    %v547 = vmul.f32 %v34, %v535
    %v548 = vmul.f32 %v35, %v535
    %v549 = vmul.f32 %v36, %v535
    %v550 = vmul.f32 %v37, %v539
    %v551 = vmul.f32 %v38, %v539
    %v552 = vmul.f32 %v39, %v539
    %v553 = vmul.f32 %v40, %v539
    %v554 = vmul.f32 %v41, %v539
    %v555 = vmul.f32 %v42, %v539
    %v556 = vmul.f32 %v43, %v539
    %v557 = vmul.f32 %v44, %v539
    %558 = vst.msk [vmem:[#allocation5] sm:$0xff] %vm45, %v542
    %559 = vst.msk [vmem:[#allocation5 + $0x8] sm:$0xff] %vm45, %v543
    %560 = vst.msk [vmem:[#allocation5 + $0x10] sm:$0xff] %vm45, %v544
    %561 = vst.msk [vmem:[#allocation5 + $0x18] sm:$0xff] %vm45, %v545
    %562 = vst.msk [vmem:[#allocation5 + $0x20] sm:$0xff] %vm45, %v546
    %563 = vst.msk [vmem:[#allocation5 + $0x28] sm:$0xff] %vm45, %v547
    %564 = vst.msk [vmem:[#allocation5 + $0x30] sm:$0xff] %vm45, %v548
    %565 = vst.msk [vmem:[#allocation5 + $0x38] sm:$0xff] %vm45, %v549
    %566 = vst.msk [vmem:[#allocation5 + $0x40] sm:$0xff] %vm45, %v550
    %567 = vst.msk [vmem:[#allocation5 + $0x48] sm:$0xff] %vm45, %v551
    %568 = vst.msk [vmem:[#allocation5 + $0x50] sm:$0xff] %vm45, %v552
    %569 = vst.msk [vmem:[#allocation5 + $0x58] sm:$0xff] %vm45, %v553
    %570 = vst.msk [vmem:[#allocation5 + $0x60] sm:$0xff] %vm45, %v554
    %571 = vst.msk [vmem:[#allocation5 + $0x68] sm:$0xff] %vm45, %v555
    %572 = vst.msk [vmem:[#allocation5 + $0x70] sm:$0xff] %vm45, %v556
    %573 = vst.msk [vmem:[#allocation5 + $0x78] sm:$0xff] %vm45, %v557
    // Predicated region
    $region18: #{tpu_custom_call.1} parent=1 // pred_check
      _
    $region19: #{tpu_custom_call.1} parent=1 // pred_check_branch
      %575 = sbr.rel (0) target = $region21
    $region20: #{tpu_custom_call.1} parent=1 // pred_region
      %s577 = ssub.s32 2048, 2048
      %578 = vsyncadd [#allocation4], %s577
      %s579 = sshll.u32 [#allocation5], 4
      %s580 = int_to_ptr.vmem [resolvable:$true] %s579
      %585 = dma.vmem_to_hbm [thread:$0]  %s580, 2048, %s3, [#allocation4], 128, 128, 8
    $region21: #{tpu_custom_call.1} parent=1 // pred_fallthru
      _
    // Predicated region
    $region22: #{tpu_custom_call.1} parent=1 // pred_check
      _
    $region23: #{tpu_custom_call.1} parent=1 // pred_check_branch
      %587 = sbr.rel (0) target = $region25
    $region24: #{tpu_custom_call.1} parent=1 // pred_region
      %588 = dma.done [#allocation4], 2048
    $region25: #{tpu_custom_call.1} parent=1 // pred_fallthru
      _
    %589 = vsyncpa [#allocation3], 1
    %590 = vsyncpa [#allocation4], 1

</llo_original>
